<compile_context>
chip_gen: v6e
topology: v6e:2x2x1
jax: 0.10.0
libtpu: 0.0.40
codegen_flags: <defaults>
</compile_context>

<pallas_src>
import jax
import jax.numpy as jnp
from jax import lax
from jax.experimental import pallas as pl
from jax.experimental.pallas import tpu as pltpu


def _round_up(a, b):
    return ((a + b - 1) // b) * b


# ------------------------- small / single-block path -------------------------
def _small_linear_kernel(x_ref, w_ref, b_ref, o_ref):
    # x: (N, K)  w: (O, K)  b: (1, O)  ->  o: (N, O)
    acc = lax.dot_general(
        x_ref[...], w_ref[...],
        dimension_numbers=(((1,), (1,)), ((), ())),
        preferred_element_type=jnp.float32)
    o_ref[...] = (acc + b_ref[...].astype(jnp.float32)).astype(o_ref.dtype)


# ------------------------------ tiled MXU path -------------------------------
def _tiled_linear_kernel(x_ref, w_ref, b_ref, o_ref, acc_ref):
    # x: (tm, tk)  w: (tn, tk)  b: (1, tn)  o: (tm, tn)  acc: (tm, tn) f32
    k = pl.program_id(2)

    @pl.when(k == 0)
    def _():
        acc_ref[...] = jnp.zeros_like(acc_ref)

    acc_ref[...] += lax.dot_general(
        x_ref[...], w_ref[...],
        dimension_numbers=(((1,), (1,)), ((), ())),   # contract K with K
        preferred_element_type=jnp.float32)

    @pl.when(k == pl.num_programs(2) - 1)
    def _():
        o_ref[...] = (acc_ref[...] + b_ref[...].astype(jnp.float32)).astype(o_ref.dtype)


def hgnn_fc_forward(x, weight, bias, *, tm=256, tn=256, tk=512):
    """Pallas TPU implementation of nn.Linear: y = x @ weight.T + bias.

    x:      (N, in_ch)
    weight: (out_ch, in_ch)   (PyTorch convention, used directly -- no transpose)
    bias:   (out_ch,)
    returns (N, out_ch) in x.dtype.  Pass bf16 x/weight for the bf16 MXU path
    (accumulation is always f32).
    """
    N, K = x.shape
    O, K2 = weight.shape
    assert K == K2, "in_ch mismatch"
    out_dtype = x.dtype
    b2 = bias.reshape(1, O)

    # -------- tiny problems: one block, no grid (grid-step overhead dominates)
    if N <= tm and O <= tn and K <= tk:
        return pl.pallas_call(
            _small_linear_kernel,
            out_shape=jax.ShapeDtypeStruct((N, O), out_dtype),
        )(x, weight, b2)

    # -------- tiled path: (j, i, k) grid, f32 accumulator resident across k
    tm = min(tm, _round_up(N, 8))      # sublane-aligned
    tn = min(tn, _round_up(O, 128))    # lane-dense output
    tk = min(tk, _round_up(K, 128))

    Np, Op, Kp = _round_up(N, tm), _round_up(O, tn), _round_up(K, tk)
    # Zero-pad so every dim divides its tile (K padding must be zeros so the
    # extra reduction terms contribute nothing).
    if (Np, Kp) != (N, K):
        x = jnp.pad(x, ((0, Np - N), (0, Kp - K)))
    if (Op, Kp) != (O, K):
        weight = jnp.pad(weight, ((0, Op - O), (0, Kp - K)))
    if Op != O:
        b2 = jnp.pad(b2, ((0, 0), (0, Op - O)))

    grid = (Op // tn, Np // tm, Kp // tk)   # j outermost, i middle, k innermost

    itemsize = jnp.dtype(out_dtype).itemsize
    cost = pl.CostEstimate(
        flops=2 * N * K * O,
        transcendentals=0,
        bytes_accessed=(N * K + O * K + N * O + O) * itemsize)

    out = pl.pallas_call(
        _tiled_linear_kernel,
        out_shape=jax.ShapeDtypeStruct((Np, Op), out_dtype),
        grid_spec=pltpu.PrefetchScalarGridSpec(
            num_scalar_prefetch=0,
            grid=grid,
            in_specs=[
                pl.BlockSpec((tm, tk), lambda j, i, k: (i, k)),   # x tile
                pl.BlockSpec((tn, tk), lambda j, i, k: (j, k)),   # W tile (O,K), no transpose
                pl.BlockSpec((1, tn), lambda j, i, k: (0, j)),    # bias tile
            ],
            out_specs=pl.BlockSpec((tm, tn), lambda j, i, k: (i, j)),
            scratch_shapes=[pltpu.VMEM((tm, tn), jnp.float32)],
        ),
        compiler_params=pltpu.CompilerParams(
            dimension_semantics=("parallel", "parallel", "arbitrary"),
            vmem_limit_bytes=32 * 1024 * 1024,
        ),
        cost_estimate=cost,
    )(x, weight, b2)

    if (Np, Op) != (N, O):
        out = out[:N, :O]
    return out


def init_hgnn_fc_params(key, in_ch, out_ch, dtype=jnp.float32):
    """Deterministic init mimicking PyTorch nn.Linear defaults."""
    kw, kb = jax.random.split(key)
    bound = 1.0 / jnp.sqrt(in_ch)
    weight = jax.random.uniform(kw, (out_ch, in_ch), dtype, -bound, bound)
    bias = jax.random.uniform(kb, (out_ch,), dtype, -bound, bound)
    return weight, bias


if __name__ == "__main__":
    key = jax.random.PRNGKey(0)
    kx, kp, kx2, kp2 = jax.random.split(key, 4)

    # ---- small path (matches HGNN_fc demo scale): N=8, in_ch=32, out_ch=16
    N, in_ch, out_ch = 8, 32, 16
    x = jax.random.normal(kx, (N, in_ch), jnp.float32)
    weight, bias = init_hgnn_fc_params(kp, in_ch, out_ch)

    y = jax.block_until_ready(hgnn_fc_forward(x, weight, bias))
    y_ref = x @ weight.T + bias
    assert y.shape == (N, out_ch)
    assert jnp.allclose(y, y_ref, atol=1e-2, rtol=1e-2), "small-path mismatch"

    # ---- tiled path (K-reduction grid + padding + accumulator), bf16 operands
    N2, in2, out2 = 384, 300, 200
    x2 = jax.random.normal(kx2, (N2, in2), jnp.float32)
    w2, b2 = init_hgnn_fc_params(kp2, in2, out2)
    x2b = x2.astype(jnp.bfloat16)
    w2b = w2.astype(jnp.bfloat16)

    y2 = jax.block_until_ready(
        hgnn_fc_forward(x2b, w2b, b2, tm=128, tn=128, tk=128))
    y2_ref = x2b.astype(jnp.float32) @ w2b.astype(jnp.float32).T + b2
    assert y2.shape == (N2, out2)
    assert jnp.allclose(y2.astype(jnp.float32), y2_ref, atol=2e-2, rtol=2e-2), \
        "tiled-path mismatch"

    print("KERNEL_OK")
</pallas_src>

<mosaic_0001>
module attributes {stable_mosaic.version = 11 : i64} {
  func.func @_small_linear_kernel(%arg0: memref<8x32xf32, #tpu.memory_space<vmem>>, %arg1: memref<16x32xf32, #tpu.memory_space<vmem>>, %arg2: memref<1x16xf32, #tpu.memory_space<vmem>>, %arg3: memref<8x16xf32, #tpu.memory_space<vmem>>) attributes {dimension_semantics = [], scalar_prefetch = 0 : i64, scratch_operands = 0 : i64, tpu.core_type = #tpu.core_type<tc>} {
    %c0 = arith.constant 0 : index
    %c0_0 = arith.constant 0 : index
    %0 = vector.load %arg0[%c0, %c0_0] : memref<8x32xf32, #tpu.memory_space<vmem>>, vector<8x32xf32>
    %c0_1 = arith.constant 0 : index
    %c0_2 = arith.constant 0 : index
    %1 = vector.load %arg1[%c0_1, %c0_2] : memref<16x32xf32, #tpu.memory_space<vmem>>, vector<16x32xf32>
    %cst = arith.constant dense<0.000000e+00> : vector<8x16xf32>
    %2 = tpu.matmul %0, %1, %cst {dimension_numbers = #tpu.dot_dimension_numbers<[1], [1], [0], [0], [0, 0, 1, 0], [], []>} : vector<8x32xf32>, vector<16x32xf32>, vector<8x16xf32> -> vector<8x16xf32>
    %c0_3 = arith.constant 0 : index
    %c0_4 = arith.constant 0 : index
    %3 = vector.load %arg2[%c0_3, %c0_4] : memref<1x16xf32, #tpu.memory_space<vmem>>, vector<1x16xf32>
    %4 = vector.broadcast %3 : vector<1x16xf32> to vector<8x16xf32>
    %5 = arith.addf %2, %4 : vector<8x16xf32>
    %c0_5 = arith.constant 0 : index
    %c0_6 = arith.constant 0 : index
    %6 = vector.load %arg3[%c0_5, %c0_6] : memref<8x16xf32, #tpu.memory_space<vmem>>, vector<8x16xf32>
    tpu.vector_store %arg3[%c0_5, %c0_6], %5 {strides = array<i32>} : memref<8x16xf32, #tpu.memory_space<vmem>>, vector<8x16xf32>,
    return
  }
}

</mosaic_0001>

<llo_original>
// kernel: tpu_custom_call.1
$region0: #{tpu_custom_call.1}
  #allocation0 [shape = 'u32[]', space=smem, size = 0x4, offset = 0x4, fixed_abs, tag = 'smem constant byte address 0x4 - core index']
  #allocation1 [shape = 'u32[144,128]{1,0:T(1,128)}', space=vmem, size = 0x12000, scoped, tag = 'internal scratch']
  %s0 = inlined_call_operand.hbm [shape: f32[8,32], index: 0, kind: input, shape index: {}]
  %s1 = inlined_call_operand.hbm [shape: f32[16,32], index: 1, kind: input, shape index: {}]
  %s2 = inlined_call_operand.vmem [shape: f32[1,16], index: 2, kind: input, shape index: {}]
  %s3 = inlined_call_operand.hbm [shape: f32[8,16], index: 3, kind: output, shape index: {}]
  %s4 = sld [smem:[#allocation0]]
  $region30: #{tpu_custom_call.1} parent=0
    _
  %s6 = ssub.s32 1, %s4
  %s7 = scalar_select 0, %s6, %s4
  $region1: #{tpu_custom_call.1} parent=0
    #allocation2 [shape = 'u8[4096]{0}', space=vmem, size = 0x1000, scoped, tag = 'input window, operand 0, single buffered']
    #allocation3 [shape = 's32[1]{0}', space=sflag, size = 0x4, scoped, tag = 'scoped memory for tpu_custom_call.1']
    #allocation4 [shape = 's32[1]{0}', space=sflag, size = 0x4, scoped, tag = 'scoped memory for tpu_custom_call.1']
    #allocation5 [shape = 'u8[8192]{0}', space=vmem, size = 0x2000, scoped, tag = 'input window, operand 1, single buffered']
    #allocation6 [shape = 's32[1]{0}', space=sflag, size = 0x4, scoped, tag = 'scoped memory for tpu_custom_call.1']
    #allocation7 [shape = 'u8[4096]{0}', space=vmem, size = 0x1000, scoped, tag = 'output window, operand 0, single buffered']
    %8 = vsyncpa [#allocation3], 0
    %9 = vsyncpa [#allocation6], 0
    %10 = vsyncpa [#allocation4], 0
    // Predicated region
    $region2: #{tpu_custom_call.1} parent=1 // pred_check
      _
    $region3: #{tpu_custom_call.1} parent=1 // pred_check_branch
      %12 = sbr.rel (0) target = $region5
    $region4: #{tpu_custom_call.1} parent=1 // pred_region
      %s14 = ssub.s32 128, 128
      %15 = vsyncadd [#allocation3], %s14
      %s17 = sshll.u32 [#allocation2], 4
      %s18 = int_to_ptr.vmem [resolvable:$true] %s17
      %20 = dma.hbm_to_vmem [thread:$0]  %s0, 128, %s18, [#allocation3]
    $region5: #{tpu_custom_call.1} parent=1 // pred_fallthru
      _
    // Predicated region
    $region6: #{tpu_custom_call.1} parent=1 // pred_check
      _
    $region7: #{tpu_custom_call.1} parent=1 // pred_check_branch
      %22 = sbr.rel (0) target = $region9
    $region8: #{tpu_custom_call.1} parent=1 // pred_region
      %s24 = ssub.s32 256, 256
      %25 = vsyncadd [#allocation6], %s24
      %s26 = sshll.u32 [#allocation5], 4
      %s27 = int_to_ptr.vmem [resolvable:$true] %s26
      %32 = dma.hbm_to_vmem [thread:$0]  %s1, 256, %s27, [#allocation6], 128, 128, 8
    $region9: #{tpu_custom_call.1} parent=1 // pred_fallthru
      _
    // Predicated region
    $region10: #{tpu_custom_call.1} parent=1 // pred_check
      _
    $region11: #{tpu_custom_call.1} parent=1 // pred_check_branch
      %34 = sbr.rel (0) target = $region13
    $region12: #{tpu_custom_call.1} parent=1 // pred_region
      _
    $region13: #{tpu_custom_call.1} parent=1 // pred_fallthru
      _
    // Predicated region
    $region14: #{tpu_custom_call.1} parent=1 // pred_check
      _
    $region15: #{tpu_custom_call.1} parent=1 // pred_check_branch
      %36 = sbr.rel (0) target = $region17
    $region16: #{tpu_custom_call.1} parent=1 // pred_region
      %37 = dma.done [#allocation3], 128
    $region17: #{tpu_custom_call.1} parent=1 // pred_fallthru
      _
    // Predicated region
    $region18: #{tpu_custom_call.1} parent=1 // pred_check
      _
    $region19: #{tpu_custom_call.1} parent=1 // pred_check_branch
      %39 = sbr.rel (0) target = $region21
    $region20: #{tpu_custom_call.1} parent=1 // pred_region
      %40 = dma.done [#allocation6], 256
    $region21: #{tpu_custom_call.1} parent=1 // pred_fallthru
      _
    %v41 = vld [vmem:[#allocation2] sm:$0xff]
    %v42 = vld [vmem:[#allocation5] sm:$0xff]
    %v43 = vld [vmem:[#allocation5 + $0x8] sm:$0xff]
    %v44 = vld [vmem:[%s2] sm:$0x1]
    %v46 = vlaneseq
    %v47 = vshrl.u32 %v46, 7
    %v48 = vsub.s32 0, %v47
    %v49 = vrot.slane %v44, %v48
    %vm51 = vcmask 261120
    %v53 = vsel %vm51, %v41, 0
    %v56 = vsel %vm51, %v42, 0
    %v59 = vsel %vm51, %v43, 0
    %61 = vmatprep.subr.mxu0 0.0
    %62 = vmatpush1.xpose.msra.mxu0 0.0
    %63 = vmatprep.subr.mxu0 0.0
    %64 = vmatpush1.xpose.msra.mxu0 0.0
    %65 = vmatprep.subr.mxu0 0.0
    %66 = vmatpush1.xpose.msra.mxu0 0.0
    %67 = vmatprep.subr.mxu0 0.0
    %68 = vmatpush1.xpose.msra.mxu0 0.0
    %69 = vmatprep.subr.mxu0 0.0
    %70 = vmatpush1.xpose.msra.mxu0 0.0
    %71 = vmatprep.subr.mxu0 0.0
    %72 = vmatpush1.xpose.msra.mxu0 0.0
    %73 = vmatprep.subr.mxu0 0.0
    %74 = vmatpush1.xpose.msra.mxu0 0.0
    %75 = vmatprep.subr.mxu0 0.0
    %76 = vmatpush1.xpose.msra.mxu0 0.0
    %77 = vmatprep.subr.mxu0 0.0
    %78 = vmatpush1.xpose.msra.mxu0 0.0
    %79 = vmatprep.subr.mxu0 0.0
    %80 = vmatpush1.xpose.msra.mxu0 0.0
    %81 = vmatprep.subr.mxu0 0.0
    %82 = vmatpush1.xpose.msra.mxu0 0.0
    %83 = vmatprep.subr.mxu0 0.0
    %84 = vmatpush1.xpose.msra.mxu0 0.0
    %85 = vmatprep.subr.mxu0 0.0
    %86 = vmatpush1.xpose.msra.mxu0 0.0
    %87 = vmatprep.subr.mxu0 0.0
    %88 = vmatpush1.xpose.msra.mxu0 0.0
    %89 = vmatprep.subr.mxu0 0.0
    %90 = vmatpush1.xpose.msra.mxu0 %v59
    %91 = vmatprep.subr.mxu0 0.0
    %92 = vmatpush1.xpose.msra.mxu0 %v56
    %93 = vmatprep.subr.mxu0 0.0
    %94 = vmatpush2.xpose.msra.mxu0 0.0
    %95 = vmatprep.subr.mxu0 0.0
    %96 = vmatpush2.xpose.msra.mxu0 0.0
    %97 = vmatprep.subr.mxu0 0.0
    %98 = vmatpush2.xpose.msra.mxu0 0.0
    %99 = vmatprep.subr.mxu0 0.0
    %100 = vmatpush2.xpose.msra.mxu0 0.0
    %101 = vmatprep.subr.mxu0 0.0
    %102 = vmatpush2.xpose.msra.mxu0 0.0
    %103 = vmatprep.subr.mxu0 0.0
    %104 = vmatpush2.xpose.msra.mxu0 0.0
    %105 = vmatprep.subr.mxu0 0.0
    %106 = vmatpush2.xpose.msra.mxu0 0.0
    %107 = vmatprep.subr.mxu0 0.0
    %108 = vmatpush2.xpose.msra.mxu0 0.0
    %109 = vmatprep.subr.mxu0 0.0
    %110 = vmatpush2.xpose.msra.mxu0 0.0
    %111 = vmatprep.subr.mxu0 0.0
    %112 = vmatpush2.xpose.msra.mxu0 0.0
    %113 = vmatprep.subr.mxu0 0.0
    %114 = vmatpush2.xpose.msra.mxu0 0.0
    %115 = vmatprep.subr.mxu0 0.0
    %116 = vmatpush2.xpose.msra.mxu0 0.0
    %117 = vmatprep.subr.mxu0 0.0
    %118 = vmatpush2.xpose.msra.mxu0 0.0
    %119 = vmatprep.subr.mxu0 0.0
    %120 = vmatpush2.xpose.msra.mxu0 0.0
    %121 = vmatprep.subr.mxu0 0.0
    %122 = vmatpush2.xpose.msra.mxu0 0.0
    %123 = vmatprep.subr.mxu0 0.0
    %124 = vmatpush2.xpose.msra.mxu0 0.0
    %125 = vmatprep.mubr.f32.mxu0 0.0
    %126 = vmatmul.mubr.f32.gmra.mxu0 %v53
    %v127 = vpop.f32.mrf.mxu0
    %v128 = vadd.f32 %v49, %v127
    %v129 = vpop.f32.mrf.mxu0
    %130 = vdwg.mxu0
    %vm131 = vcmask 130048
    %132 = vst.msk [vmem:[#allocation7] sm:$0xff] %vm131, %v128
    // Predicated region
    $region22: #{tpu_custom_call.1} parent=1 // pred_check
      _
    $region23: #{tpu_custom_call.1} parent=1 // pred_check_branch
      %134 = sbr.rel (0) target = $region25
    $region24: #{tpu_custom_call.1} parent=1 // pred_region
      %s136 = ssub.s32 128, 128
      %137 = vsyncadd [#allocation4], %s136
      %s139 = sshll.u32 [#allocation7], 4
      %s140 = int_to_ptr.vmem [resolvable:$true] %s139
      %142 = dma.vmem_to_hbm [thread:$0]  %s140, 128, %s3, [#allocation4]
    $region25: #{tpu_custom_call.1} parent=1 // pred_fallthru
      _
    // Predicated region
    $region26: #{tpu_custom_call.1} parent=1 // pred_check
      _
    $region27: #{tpu_custom_call.1} parent=1 // pred_check_branch
      %144 = sbr.rel (0) target = $region29
    $region28: #{tpu_custom_call.1} parent=1 // pred_region
      %145 = dma.done [#allocation4], 128
    $region29: #{tpu_custom_call.1} parent=1 // pred_fallthru
      _
    %146 = vsyncpa [#allocation3], 1
    %147 = vsyncpa [#allocation6], 1
    %148 = vsyncpa [#allocation4], 1

</llo_original>
